<compile_context>
chip_gen: v5e
topology: v5e:2x2
jax: 0.10.0
libtpu: 0.0.40
codegen_flags: <defaults>
</compile_context>

<pallas_src>
import functools
import math

import jax
import jax.numpy as jnp
from jax.experimental import pallas as pl
from jax.experimental.pallas import tpu as pltpu


# -----------------------------------------------------------------------------
# Kernels
# -----------------------------------------------------------------------------
def _linear_single_block_kernel(x_ref, wt_ref, o_ref):
    # Whole problem in VMEM: one dot, one store. x:(B,K), wt:(K,N), o:(B,N).
    o_ref[...] = jnp.dot(
        x_ref[...], wt_ref[...], preferred_element_type=jnp.float32
    ).astype(o_ref.dtype)


def _linear_tiled_f32_kernel(x_ref, wt_ref, o_ref):
    # f32 output: accumulate directly into the resident output tile (no scratch).
    @pl.when(pl.program_id(2) == 0)
    def _init():
        o_ref[...] = jnp.zeros_like(o_ref)

    o_ref[...] += jnp.dot(
        x_ref[...], wt_ref[...], preferred_element_type=jnp.float32
    )


def _linear_tiled_cast_kernel(x_ref, wt_ref, o_ref, acc_ref):
    # Narrow output dtype: accumulate in an f32 scratch, cast on the last K step.
    @pl.when(pl.program_id(2) == 0)
    def _init():
        acc_ref[...] = jnp.zeros_like(acc_ref)

    acc_ref[...] += jnp.dot(
        x_ref[...], wt_ref[...], preferred_element_type=jnp.float32
    )

    @pl.when(pl.program_id(2) == pl.num_programs(2) - 1)
    def _store():
        o_ref[...] = acc_ref[...].astype(o_ref.dtype)


# -----------------------------------------------------------------------------
# Helpers
# -----------------------------------------------------------------------------
def _round_up(v: int, m: int) -> int:
    return -(-v // m) * m


def _sublane_align(dtype) -> int:
    # Sub-32-bit dtypes pack along sublanes: 16 rows for bf16, 32 for 8-bit.
    return {4: 8, 2: 16, 1: 32}.get(jnp.dtype(dtype).itemsize, 8)


def _fit_tile(dim: int, max_tile: int, align: int) -> int:
    """Largest aligned tile <= max_tile that minimizes padding waste for `dim`."""
    if dim <= max_tile:
        return _round_up(dim, align)
    n_blocks = -(-dim // max_tile)
    return _round_up(-(-dim // n_blocks), align)


# -----------------------------------------------------------------------------
# Wrapper
# -----------------------------------------------------------------------------
@functools.partial(
    jax.jit, static_argnames=("tm", "tn", "tk", "single_block_bytes")
)
def linear_no_bias(x, weight, *, tm=512, tn=512, tk=1024,
                   single_block_bytes=4 * 1024 * 1024):
    """y = x @ weight.T (PyTorch nn.Linear(bias=False) semantics).

    x:      (B, in_features)
    weight: (out_features, in_features)
    """
    B, K = x.shape
    N, K2 = weight.shape
    assert K == K2, "in_features mismatch"

    # One-time host-side transpose: (K, N) RHS means the kernel never emits an
    # XLU transpose of the weight tile; amortized over all grid steps / calls.
    wt = weight.T  # (K, N)

    itemsize = jnp.dtype(x.dtype).itemsize
    true_bytes = (B * K + K * N + B * N) * itemsize
    true_flops = 2 * B * N * K

    # ---- Small-problem path: whole problem as a single VMEM block ----------
    if true_bytes <= single_block_bytes:
        return pl.pallas_call(
            _linear_single_block_kernel,
            out_shape=jax.ShapeDtypeStruct((B, N), x.dtype),
            grid=(1,),
            in_specs=[
                pl.BlockSpec((B, K), lambda i: (0, 0)),
                pl.BlockSpec((K, N), lambda i: (0, 0)),
            ],
            out_specs=pl.BlockSpec((B, N), lambda i: (0, 0)),
            cost_estimate=pl.CostEstimate(
                flops=true_flops, transcendentals=0, bytes_accessed=true_bytes
            ),
        )(x, wt)

    # ---- General tiled path for large shapes --------------------------------
    sub = _sublane_align(x.dtype)
    tm = _fit_tile(B, tm, sub)
    tk = _fit_tile(K, tk, 128)
    tn = _fit_tile(N, tn, 128)

    Mp, Kp, Np = _round_up(B, tm), _round_up(K, tk), _round_up(N, tn)

    # Zero-pad ragged shapes (zero K-padding contributes nothing to the sum).
    x_p = x if (Mp == B and Kp == K) else jnp.pad(x, ((0, Mp - B), (0, Kp - K)))
    wt_p = wt if (Kp == K and Np == N) else jnp.pad(wt, ((0, Kp - K), (0, Np - N)))

    grid = (Mp // tm, Np // tn, Kp // tk)

    out_is_f32 = jnp.dtype(x.dtype) == jnp.float32
    kernel = _linear_tiled_f32_kernel if out_is_f32 else _linear_tiled_cast_kernel
    scratch = [] if out_is_f32 else [pltpu.VMEM((tm, tn), jnp.float32)]

    out_p = pl.pallas_call(
        kernel,
        out_shape=jax.ShapeDtypeStruct((Mp, Np), x.dtype),
        grid_spec=pltpu.PrefetchScalarGridSpec(
            num_scalar_prefetch=0,
            grid=grid,
            in_specs=[
                pl.BlockSpec((tm, tk), lambda i, j, k: (i, k)),  # x tile
                pl.BlockSpec((tk, tn), lambda i, j, k: (k, j)),  # W^T tile
            ],
            out_specs=pl.BlockSpec((tm, tn), lambda i, j, k: (i, j)),
            scratch_shapes=scratch,
        ),
        compiler_params=pltpu.CompilerParams(
            dimension_semantics=("parallel", "parallel", "arbitrary"),
        ),
        cost_estimate=pl.CostEstimate(
            flops=true_flops,            # true problem cost, not padded
            transcendentals=0,
            bytes_accessed=true_bytes,
        ),
    )(x_p, wt_p)

    return out_p[:B, :N]


if __name__ == "__main__":
    key = jax.random.PRNGKey(0)
    kx, kw = jax.random.split(key)

    # Shapes consistent with the module: Linear(in_features=10, out_features=10)
    B, IN, OUT = 8, 10, 10
    x = jax.random.normal(kx, (B, IN), dtype=jnp.float32)
    # Deterministic init mimicking nn.Linear's kaiming-uniform bound 1/sqrt(in)
    bound = 1.0 / math.sqrt(IN)
    weight = jax.random.uniform(kw, (OUT, IN), jnp.float32, -bound, bound)

    y = linear_no_bias(x, weight)
    jax.block_until_ready(y)

    # Correctness check against plain JAX reference
    y_ref = x @ weight.T
    assert y.shape == (B, OUT)
    assert jnp.allclose(y, y_ref, atol=1e-5, rtol=1e-5)

    print("KERNEL_OK")
</pallas_src>

<mosaic_0001>
module attributes {stable_mosaic.version = 11 : i64} {
  func.func @_linear_single_block_kernel(%arg0: i32, %arg1: memref<8x10xf32, #tpu.memory_space<vmem>>, %arg2: memref<10x10xf32, #tpu.memory_space<vmem>>, %arg3: memref<8x10xf32, #tpu.memory_space<vmem>>) attributes {dimension_semantics = [#tpu.dimension_semantics<arbitrary>], iteration_bounds = array<i64: 1>, scalar_prefetch = 0 : i64, scratch_operands = 0 : i64, tpu.core_type = #tpu.core_type<tc>, window_params = [{pipeline_mode = #tpu.pipeline_mode<synchronous>, transform_indices = @transform_0, window_bounds = array<i64: 8, 10>}, {pipeline_mode = #tpu.pipeline_mode<synchronous>, transform_indices = @transform_1, window_bounds = array<i64: 10, 10>}, {pipeline_mode = #tpu.pipeline_mode<synchronous>, transform_indices = @transform_2, window_bounds = array<i64: 8, 10>}]} {
    %c0 = arith.constant 0 : index
    %c0_0 = arith.constant 0 : index
    %0 = vector.load %arg1[%c0, %c0_0] : memref<8x10xf32, #tpu.memory_space<vmem>>, vector<8x10xf32>
    %c0_1 = arith.constant 0 : index
    %c0_2 = arith.constant 0 : index
    %1 = vector.load %arg2[%c0_1, %c0_2] : memref<10x10xf32, #tpu.memory_space<vmem>>, vector<10x10xf32>
    %cst = arith.constant dense<0.000000e+00> : vector<8x10xf32>
    %2 = tpu.matmul %0, %1, %cst {dimension_numbers = #tpu.dot_dimension_numbers<[1], [0], [0], [1], [0, 0, 1, 1], [], []>} : vector<8x10xf32>, vector<10x10xf32>, vector<8x10xf32> -> vector<8x10xf32>
    %c0_3 = arith.constant 0 : index
    %c0_4 = arith.constant 0 : index
    %3 = vector.load %arg3[%c0_3, %c0_4] : memref<8x10xf32, #tpu.memory_space<vmem>>, vector<8x10xf32>
    tpu.vector_store %arg3[%c0_3, %c0_4], %2 {strides = array<i32>} : memref<8x10xf32, #tpu.memory_space<vmem>>, vector<8x10xf32>,
    return
  }
  func.func @transform_0(%arg0: i32) -> (i32, i32) {
    %c0_i32 = arith.constant 0 : i32
    %c0_i32_0 = arith.constant 0 : i32
    %c0_i32_1 = arith.constant 0 : i32
    return %c0_i32, %c0_i32_0 : i32, i32
  }
  func.func @transform_1(%arg0: i32) -> (i32, i32) {
    %c0_i32 = arith.constant 0 : i32
    %c0_i32_0 = arith.constant 0 : i32
    %c0_i32_1 = arith.constant 0 : i32
    return %c0_i32, %c0_i32_0 : i32, i32
  }
  func.func @transform_2(%arg0: i32) -> (i32, i32) {
    %c0_i32 = arith.constant 0 : i32
    %c0_i32_0 = arith.constant 0 : i32
    %c0_i32_1 = arith.constant 0 : i32
    return %c0_i32, %c0_i32_0 : i32, i32
  }
}

</mosaic_0001>

<llo_original>
// kernel: linear_no_bias.1
$region0: #{linear_no_bias.1}
  #allocation0 [shape = 'u32[]', space=smem, size = 0x4, offset = 0x4, fixed_abs, tag = 'smem constant byte address 0x4 - core index']
  #allocation1 [shape = 'u32[72,128]{1,0:T(1,128)}', space=vmem, size = 0x9000, scoped, tag = 'internal scratch']
  %s0 = inlined_call_operand.vmem [shape: f32[8,10], index: 0, kind: input, shape index: {}]
  %s1 = inlined_call_operand.vmem [shape: f32[10,10], index: 1, kind: input, shape index: {}]
  %s2 = inlined_call_operand.hbm [shape: f32[8,10], index: 2, kind: output, shape index: {}]
  %s3 = sld [smem:[#allocation0]]
  $region18: #{linear_no_bias.1} parent=0
    _
  %s5 = ssub.s32 1, %s3
  %s6 = scalar_select 0, %s5, %s3
  $region1: #{linear_no_bias.1} parent=0
    #allocation2 [shape = 'u8[4096]{0}', space=vmem, size = 0x1000, scoped, tag = 'output window, operand 0, single buffered']
    #allocation3 [shape = 's32[1]{0}', space=sflag, size = 0x4, scoped, tag = 'scoped memory for linear_no_bias.1']
    %7 = vsyncpa [#allocation3], 0
    // Predicated region
    $region2: #{linear_no_bias.1} parent=1 // pred_check
      _
    $region3: #{linear_no_bias.1} parent=1 // pred_check_branch
      %9 = sbr.rel (0) target = $region5
    $region4: #{linear_no_bias.1} parent=1 // pred_region
      _
    $region5: #{linear_no_bias.1} parent=1 // pred_fallthru
      _
    // Predicated region
    $region6: #{linear_no_bias.1} parent=1 // pred_check
      _
    $region7: #{linear_no_bias.1} parent=1 // pred_check_branch
      %11 = sbr.rel (0) target = $region9
    $region8: #{linear_no_bias.1} parent=1 // pred_region
      _
    $region9: #{linear_no_bias.1} parent=1 // pred_fallthru
      _
    %v12 = vld [vmem:[%s0] sm:$0xff]
    %v13 = vld [vmem:[%s1] sm:$0xff]
    %v14 = vld [vmem:[%s1 + $0x8] sm:$0x3]
    %vm15 = vcmask 80896
    %v17 = vsel %vm15, %v12, 0
    %vm19 = vcmask 1041408
    %v21 = vsel %vm19, %v14, 0
    %23 = vmatpush.msra.mxu0 0.0
    %24 = vmatpush.msra.mxu0 0.0
    %25 = vmatpush.msra.mxu0 0.0
    %26 = vmatpush.msra.mxu0 0.0
    %27 = vmatpush.msra.mxu0 0.0
    %28 = vmatpush.msra.mxu0 0.0
    %29 = vmatpush.msra.mxu0 0.0
    %30 = vmatpush.msra.mxu0 0.0
    %31 = vmatpush.msra.mxu0 0.0
    %32 = vmatpush.msra.mxu0 0.0
    %33 = vmatpush.msra.mxu0 0.0
    %34 = vmatpush.msra.mxu0 0.0
    %35 = vmatpush.msra.mxu0 0.0
    %36 = vmatpush.msra.mxu0 0.0
    %37 = vmatpush.msra.mxu0 %v21
    %38 = vmatpush.msra.mxu0 %v13
    %39 = vmatmul.f32.gmra.mxu0 %v17
    %v40 = vpop.f32.mrf.mxu0
    %v41 = vadd.f32 0.0, %v40
    %42 = vdwg.mxu0
    %43 = vst.msk [vmem:[#allocation2] sm:$0xff] %vm15, %v41
    // Predicated region
    $region10: #{linear_no_bias.1} parent=1 // pred_check
      _
    $region11: #{linear_no_bias.1} parent=1 // pred_check_branch
      %45 = sbr.rel (0) target = $region13
    $region12: #{linear_no_bias.1} parent=1 // pred_region
      %47 = vsyncadd [#allocation3], 0
      %s49 = sshll.u32 [#allocation2], 4
      %s50 = int_to_ptr.vmem [resolvable:$true] %s49
      %s51 = sshll.u32 %s2, 4
      %s52 = int_to_ptr.hbm [resolvable:$true] %s51
      %54 = dma.vmem_to_hbm [thread:$0]  %s50, 128, %s52, [#allocation3]
    $region13: #{linear_no_bias.1} parent=1 // pred_fallthru
      _
    // Predicated region
    $region14: #{linear_no_bias.1} parent=1 // pred_check
      _
    $region15: #{linear_no_bias.1} parent=1 // pred_check_branch
      %56 = sbr.rel (0) target = $region17
    $region16: #{linear_no_bias.1} parent=1 // pred_region
      %58 = dma.done [#allocation3], 128
    $region17: #{linear_no_bias.1} parent=1 // pred_fallthru
      _
    %59 = vsyncpa [#allocation3], 1

</llo_original>
